<compile_context>
chip_gen: v7x
topology: tpu7x:2x2x1
jax: 0.10.0
libtpu: 0.0.40
codegen_flags: <defaults>
</compile_context>

<pallas_src>
import functools

import jax
import jax.numpy as jnp
import numpy as np
from jax import lax
from jax.experimental import pallas as pl
from jax.experimental.pallas import tpu as pltpu

# Tile sizes (re-sweep per generation: these are modest so they fit v7x's 64 MiB
# VMEM and v5e's smaller slot budget; all multiples of (8, 128)).
_TILE_E = 512            # score-MLP tile along E (edges on lanes)
_TI = 256                # top-k: i-tile (edges being ranked, lanes)
_TJ = 256                # top-k: j-tile (competitors, sublanes; reduction axis)
_VMEM_LIMIT_BYTES = 32 * 1024 * 1024


def _round_up(x, m):
    return (x + m - 1) // m * m


# --------------------------------------------------------------------------------------
# Kernel 1: scoring MLP, edges on lanes, lane-dense [1, TILE_E] output.
# --------------------------------------------------------------------------------------
def _score_kernel(featsT_ref, w1T_ref, b1_ref, w2_ref, b2_ref, scores_ref):
    # featsT: [D, TILE_E], w1T: [H, D], b1/w2: [H, 1], b2: [1, 1]
    h = jnp.dot(w1T_ref[...], featsT_ref[...],
                preferred_element_type=jnp.float32)                    # [H, TILE_E] (MXU)
    h = jnp.maximum(h + b1_ref[...], 0.0)                              # bias + ReLU (VPU)
    # Second layer is H -> 1: do it as broadcast-multiply + sublane reduce (VPU/XLU)
    # instead of a 1-wide MXU matmul; keeps the output lane-dense.
    s = jnp.sum(h * w2_ref[...], axis=0, keepdims=True) + b2_ref[...]  # [1, TILE_E]
    scores_ref[...] = s


def mlp_score(featsT, w1T, b1c, w2c, b2c, *, tile_e=_TILE_E):
    D, E_pad = featsT.shape
    H = w1T.shape[0]
    grid = (E_pad // tile_e,)
    return pl.pallas_call(
        _score_kernel,
        out_shape=jax.ShapeDtypeStruct((1, E_pad), jnp.float32),
        grid=grid,
        in_specs=[
            pl.BlockSpec((D, tile_e), lambda i: (0, i)),
            pl.BlockSpec((H, D), lambda i: (0, 0)),
            pl.BlockSpec((H, 1), lambda i: (0, 0)),
            pl.BlockSpec((H, 1), lambda i: (0, 0)),
            pl.BlockSpec((1, 1), lambda i: (0, 0)),
        ],
        out_specs=pl.BlockSpec((1, tile_e), lambda i: (0, i)),
        compiler_params=pltpu.CompilerParams(
            dimension_semantics=("parallel",),
            vmem_limit_bytes=_VMEM_LIMIT_BYTES),
    )(featsT, w1T, b1c, w2c, b2c)


# --------------------------------------------------------------------------------------
# Kernel 2: per-dst-node top-k via tiled pairwise rank reduction.
#   comparison matrix per step: [TJ (sublanes, competitors), TI (lanes, ranked edges)]
#   rank accumulated over the j grid axis in a [1, TI] VMEM scratch.
# --------------------------------------------------------------------------------------
def _topk_mask_kernel(s_i_ref, d_i_ref, s_j_ref, d_j_ref, mask_ref, rank_ref, *, k):
    j_step = pl.program_id(1)

    @pl.when(j_step == 0)
    def _init():
        rank_ref[...] = jnp.zeros_like(rank_ref)

    ti = s_i_ref.shape[1]
    tj = s_j_ref.shape[0]
    i_base = pl.program_id(0) * ti
    j_base = j_step * tj

    s_i = s_i_ref[...]            # [1, TI]  scores of edges being ranked
    d_i = d_i_ref[...]            # [1, TI]
    s_j = s_j_ref[...]            # [TJ, 1]  scores of competitor edges
    d_j = d_j_ref[...]            # [TJ, 1]

    # Global edge ids for the stable tie-break (offset by the tile bases).
    gi = i_base + lax.broadcasted_iota(jnp.int32, (tj, ti), 1)
    gj = j_base + lax.broadcasted_iota(jnp.int32, (tj, ti), 0)

    same_dst = d_j == d_i                                              # [TJ, TI]
    beats = (s_j > s_i) | ((s_j == s_i) & (gj < gi))                   # [TJ, TI]
    rank_ref[...] += jnp.sum((same_dst & beats).astype(jnp.int32),
                             axis=0, keepdims=True)                    # [1, TI]

    @pl.when(j_step == pl.num_programs(1) - 1)
    def _finalize():
        mask_ref[...] = (rank_ref[...] < k).astype(jnp.int32)          # lane-dense [1, TI]


def topk_mask(s_row, d_row, s_col, d_col, k, *, ti=_TI, tj=_TJ):
    E_pad = s_row.shape[1]
    grid = (E_pad // ti, E_pad // tj)          # reduction axis (j) last
    return pl.pallas_call(
        functools.partial(_topk_mask_kernel, k=k),
        out_shape=jax.ShapeDtypeStruct((1, E_pad), jnp.int32),
        grid=grid,
        in_specs=[
            pl.BlockSpec((1, ti), lambda i, j: (0, i)),    # scores, i-view (lanes)
            pl.BlockSpec((1, ti), lambda i, j: (0, i)),    # dst,    i-view (lanes)
            pl.BlockSpec((tj, 1), lambda i, j: (j, 0)),    # scores, j-view (sublanes)
            pl.BlockSpec((tj, 1), lambda i, j: (j, 0)),    # dst,    j-view (sublanes)
        ],
        out_specs=pl.BlockSpec((1, ti), lambda i, j: (0, i)),
        scratch_shapes=[pltpu.VMEM((1, ti), jnp.int32)],   # per-i-tile rank accumulator
        compiler_params=pltpu.CompilerParams(
            dimension_semantics=("parallel", "arbitrary"),
            vmem_limit_bytes=_VMEM_LIMIT_BYTES),
    )(s_row, d_row, s_col, d_col)


# --------------------------------------------------------------------------------------
# Forward wrapper (mirrors SampleNet.forward)
# --------------------------------------------------------------------------------------
def samplenet_forward(x, pos, full_edge_index, w1, b1, w2, b2, k):
    """x: [N, C], pos: [N, 3], full_edge_index: [2, E] int, w1: [D, H], b1: [H],
    w2: [H], b2: [].  Returns (full_edge_index, keep_mask [E] bool, scores [E])."""
    src = full_edge_index[0].astype(jnp.int32)
    dst = full_edge_index[1].astype(jnp.int32)
    E = src.shape[0]

    # Build edge features directly in transposed (edges-on-lanes) layout; only the tiny
    # node arrays are transposed, never the big [E, D] matrix.
    xT = x.astype(jnp.float32).T                     # [C, N]
    posT = pos.astype(jnp.float32).T                 # [3, N]
    featsT = jnp.concatenate(
        [xT[:, src], xT[:, dst], posT[:, src] - posT[:, dst]], axis=0)   # [D, E]
    # TODO(synk): fuse this gather/concat into the score kernel (scalar-prefetch src/dst,
    # x/pos with memory_space=pl.ANY + per-tile row DMAs) to avoid the featsT HBM round-trip.

    pad_mult = max(_TILE_E, _TI, _TJ)
    E_pad = _round_up(E, pad_mult)
    pad = E_pad - E
    featsT = jnp.pad(featsT, ((0, 0), (0, pad)))                         # zero features
    dst_pad = jnp.pad(dst, (0, pad), constant_values=-1)                 # -1 = no real node

    H = w1.shape[1]
    w1T = w1.astype(jnp.float32).T                   # [H, D]
    b1c = b1.astype(jnp.float32).reshape(H, 1)
    w2c = w2.astype(jnp.float32).reshape(H, 1)
    b2c = b2.astype(jnp.float32).reshape(1, 1)

    scores_row = mlp_score(featsT, w1T, b1c, w2c, b2c)    # [1, E_pad] lane-dense
    # Both orientations below are metadata-only reshapes of the same contiguous buffers
    # (no XLA transpose, no in-kernel relayout needed).
    scores_col = scores_row.reshape(E_pad, 1)
    d_row = dst_pad.reshape(1, E_pad)
    d_col = dst_pad.reshape(E_pad, 1)

    mask_i32 = topk_mask(scores_row, d_row, scores_col, d_col, k)        # [1, E_pad]
    mask = mask_i32[0, :E] > 0
    scores = scores_row[0, :E]

    # TODO(synk): torch returns full_edge_index[:, mask] (data-dependent shape); JAX needs
    # static shapes, so return the boolean keep-mask alongside the edge index instead.
    return full_edge_index, mask, scores


if __name__ == "__main__":
    # Small shapes consistent with the module: N nodes, in_dim node features, 3-D positions.
    N, in_dim, hidden, k = 16, 4, 32, 3
    E = 1000                        # enough edges to exercise the grids after padding
    D = 2 * in_dim + 3

    key = jax.random.PRNGKey(0)
    k_x, k_pos, k_src, k_dst, k_w1, k_b1, k_w2, k_b2 = jax.random.split(key, 8)

    x = jax.random.normal(k_x, (N, in_dim), jnp.float32)
    pos = jax.random.normal(k_pos, (N, 3), jnp.float32)
    src = jax.random.randint(k_src, (E,), 0, N, jnp.int32)
    dst = jax.random.randint(k_dst, (E,), 0, N, jnp.int32)
    full_edge_index = jnp.stack([src, dst])                              # [2, E]

    # Deterministic params (nn.Linear-style shapes / init ranges).
    lim1 = 1.0 / (D ** 0.5)
    lim2 = 1.0 / (hidden ** 0.5)
    w1 = jax.random.uniform(k_w1, (D, hidden), jnp.float32, -lim1, lim1)
    b1 = jax.random.uniform(k_b1, (hidden,), jnp.float32, -lim1, lim1)
    w2 = jax.random.uniform(k_w2, (hidden,), jnp.float32, -lim2, lim2)
    b2 = jax.random.uniform(k_b2, (), jnp.float32, -lim2, lim2)

    edge_index_out, mask, scores = samplenet_forward(
        x, pos, full_edge_index, w1, b1, w2, b2, k)
    jax.block_until_ready((edge_index_out, mask, scores))

    # --- sanity checks against pure-JAX / numpy references of the torch module ---
    feats_ref = jnp.concatenate([x[src], x[dst], pos[src] - pos[dst]], axis=-1)
    s_ref = jnp.maximum(feats_ref @ w1 + b1, 0.0) @ w2 + b2              # [E]
    assert jnp.allclose(scores, s_ref, atol=1e-2, rtol=1e-2), "score mismatch"

    # Reference top-k mask (replicates topk_per_batch; stable argsort matches the
    # kernel's smaller-index-wins tie-break).
    scores_np = np.asarray(scores)
    dst_np = np.asarray(dst)
    mask_np = np.asarray(mask)
    mask_ref = np.zeros(E, dtype=bool)
    for node in np.unique(dst_np):
        idxs = np.nonzero(dst_np == node)[0]
        if idxs.size <= k:
            mask_ref[idxs] = True
        else:
            order = np.argsort(-scores_np[idxs], kind="stable")
            mask_ref[idxs[order[:k]]] = True
    assert np.array_equal(mask_ref, mask_np), "top-k mask mismatch"

    # Each dst node keeps at most k edges.
    for node in range(N):
        assert int(np.sum(mask_np & (dst_np == node))) <= k

    print("KERNEL_OK")
</pallas_src>

<mosaic_0001>
module attributes {stable_mosaic.version = 11 : i64} {
  func.func @_score_kernel(%arg0: i32, %arg1: memref<11x512xf32, #tpu.memory_space<vmem>>, %arg2: memref<32x11xf32, #tpu.memory_space<vmem>>, %arg3: memref<32x1xf32, #tpu.memory_space<vmem>>, %arg4: memref<32x1xf32, #tpu.memory_space<vmem>>, %arg5: memref<1x1xf32, #tpu.memory_space<vmem>>, %arg6: memref<1x512xf32, #tpu.memory_space<vmem>>) attributes {dimension_semantics = [#tpu.dimension_semantics<parallel>], iteration_bounds = array<i64: 2>, scalar_prefetch = 0 : i64, scratch_operands = 0 : i64, tpu.core_type = #tpu.core_type<tc>, window_params = [{transform_indices = @transform_0, window_bounds = array<i64: 11, 512>}, {pipeline_mode = #tpu.pipeline_mode<synchronous>, transform_indices = @transform_1, window_bounds = array<i64: 32, 11>}, {pipeline_mode = #tpu.pipeline_mode<synchronous>, transform_indices = @transform_2, window_bounds = array<i64: 32, 1>}, {pipeline_mode = #tpu.pipeline_mode<synchronous>, transform_indices = @transform_3, window_bounds = array<i64: 32, 1>}, {pipeline_mode = #tpu.pipeline_mode<synchronous>, transform_indices = @transform_4, window_bounds = array<i64: 1, 1>}, {transform_indices = @transform_5, window_bounds = array<i64: 1, 512>}]} {
    %c0 = arith.constant 0 : index
    %c0_0 = arith.constant 0 : index
    %0 = vector.load %arg2[%c0, %c0_0] : memref<32x11xf32, #tpu.memory_space<vmem>>, vector<32x11xf32>
    %c0_1 = arith.constant 0 : index
    %c0_2 = arith.constant 0 : index
    %1 = vector.load %arg1[%c0_1, %c0_2] : memref<11x512xf32, #tpu.memory_space<vmem>>, vector<11x512xf32>
    %cst = arith.constant dense<0.000000e+00> : vector<32x512xf32>
    %2 = tpu.matmul %0, %1, %cst {dimension_numbers = #tpu.dot_dimension_numbers<[1], [0], [0], [1], [0, 0, 1, 1], [], []>} : vector<32x11xf32>, vector<11x512xf32>, vector<32x512xf32> -> vector<32x512xf32>
    %c0_3 = arith.constant 0 : index
    %c0_4 = arith.constant 0 : index
    %3 = vector.load %arg3[%c0_3, %c0_4] : memref<32x1xf32, #tpu.memory_space<vmem>>, vector<32x1xf32>
    %4 = vector.broadcast %3 : vector<32x1xf32> to vector<32x512xf32>
    %5 = arith.addf %2, %4 : vector<32x512xf32>
    %cst_5 = arith.constant 0.000000e+00 : f32
    %6 = vector.broadcast %cst_5 : f32 to vector<32x512xf32>
    %7 = arith.maximumf %5, %6 : vector<32x512xf32>
    %c0_6 = arith.constant 0 : index
    %c0_7 = arith.constant 0 : index
    %8 = vector.load %arg4[%c0_6, %c0_7] : memref<32x1xf32, #tpu.memory_space<vmem>>, vector<32x1xf32>
    %9 = vector.broadcast %8 : vector<32x1xf32> to vector<32x512xf32>
    %10 = arith.mulf %7, %9 : vector<32x512xf32>
    %cst_8 = arith.constant dense<0.000000e+00> : vector<512xf32>
    %11 = vector.multi_reduction <add>, %10, %cst_8 [0] : vector<32x512xf32> to vector<512xf32>
    %12 = vector.shape_cast %11 : vector<512xf32> to vector<1x512xf32>
    %c0_9 = arith.constant 0 : index
    %c0_10 = arith.constant 0 : index
    %13 = vector.load %arg5[%c0_9, %c0_10] : memref<1x1xf32, #tpu.memory_space<vmem>>, vector<1x1xf32>
    %14 = vector.broadcast %13 : vector<1x1xf32> to vector<1x512xf32>
    %15 = arith.addf %12, %14 : vector<1x512xf32>
    %c0_11 = arith.constant 0 : index
    %c0_12 = arith.constant 0 : index
    %16 = vector.load %arg6[%c0_11, %c0_12] : memref<1x512xf32, #tpu.memory_space<vmem>>, vector<1x512xf32>
    tpu.vector_store %arg6[%c0_11, %c0_12], %15 {strides = array<i32>} : memref<1x512xf32, #tpu.memory_space<vmem>>, vector<1x512xf32>,
    return
  }
  func.func @transform_0(%arg0: i32) -> (i32, i32) {
    %c0_i32 = arith.constant 0 : i32
    %c0_i32_0 = arith.constant 0 : i32
    return %c0_i32, %arg0 : i32, i32
  }
  func.func @transform_1(%arg0: i32) -> (i32, i32) {
    %c0_i32 = arith.constant 0 : i32
    %c0_i32_0 = arith.constant 0 : i32
    %c0_i32_1 = arith.constant 0 : i32
    return %c0_i32, %c0_i32_0 : i32, i32
  }
  func.func @transform_2(%arg0: i32) -> (i32, i32) {
    %c0_i32 = arith.constant 0 : i32
    %c0_i32_0 = arith.constant 0 : i32
    %c0_i32_1 = arith.constant 0 : i32
    return %c0_i32, %c0_i32_0 : i32, i32
  }
  func.func @transform_3(%arg0: i32) -> (i32, i32) {
    %c0_i32 = arith.constant 0 : i32
    %c0_i32_0 = arith.constant 0 : i32
    %c0_i32_1 = arith.constant 0 : i32
    return %c0_i32, %c0_i32_0 : i32, i32
  }
  func.func @transform_4(%arg0: i32) -> (i32, i32) {
    %c0_i32 = arith.constant 0 : i32
    %c0_i32_0 = arith.constant 0 : i32
    %c0_i32_1 = arith.constant 0 : i32
    return %c0_i32, %c0_i32_0 : i32, i32
  }
  func.func @transform_5(%arg0: i32) -> (i32, i32) {
    %c0_i32 = arith.constant 0 : i32
    %c0_i32_0 = arith.constant 0 : i32
    return %c0_i32, %arg0 : i32, i32
  }
}

</mosaic_0001>

<llo_original>
// kernel: tpu_custom_call.1
$region0: #{tpu_custom_call.1}
  #allocation0 [shape = 'u32[]', space=smem, size = 0x4, offset = 0x4, fixed_abs, tag = 'smem constant byte address 0x4 - core index']
  #allocation1 [shape = 'u32[144,128]{1,0:T(1,128)}', space=vmem, size = 0x12000, scoped, tag = 'internal scratch']
  #allocation2 [shape = 'f32[1,1]{1,0:T(1,128)S(1)}', space=vmem, size = 0x200, scoped, tag = 'scoped memory for tpu_custom_call.1']
  %s0 = inlined_call_operand.hbm [shape: f32[11,1024], index: 0, kind: input, shape index: {}]
  %s1 = inlined_call_operand.vmem [shape: f32[32,11], index: 1, kind: input, shape index: {}]
  %s2 = inlined_call_operand.vmem [shape: f32[32,1], index: 2, kind: input, shape index: {}]
  %s3 = inlined_call_operand.vmem [shape: f32[32,1], index: 3, kind: input, shape index: {}]
  %s4 = inlined_call_operand.<no memory space> [shape: f32[1,1], index: 4, kind: input, shape index: {}]
  %s5 = inlined_call_operand.hbm [shape: f32[1,1024], index: 5, kind: output, shape index: {}]
  %s6 = sld [smem:[#allocation0]]
  $region57: #{tpu_custom_call.1} parent=0
    _
  %s8 = ssub.s32 1, %s6
  %s9 = scalar_select 0, %s8, %s6
  %v10 = vstv %s4
  %11 = vst [vmem:[#allocation2] sm:$0x1] %v10
  $region1: #{tpu_custom_call.1} parent=0
    #allocation3 [shape = 'u8[65536]{0}', space=vmem, size = 0x10000, scoped, tag = 'input window, operand 0']
    #allocation4 [shape = 's32[2]{0}', space=sflag, size = 0x8, scoped, tag = 'scoped memory for tpu_custom_call.1']
    #allocation5 [shape = 's32[2]{0}', space=sflag, size = 0x8, scoped, tag = 'scoped memory for tpu_custom_call.1']
    #allocation6 [shape = 'u8[4096]{0}', space=vmem, size = 0x1000, scoped, tag = 'output window, operand 0']
    %12 = vsyncpa [#allocation4], 0
    %s13 = scalar_lea.sflag [#allocation4], 1
    %14 = vsyncpa %s13, 0
    %15 = vsyncpa [#allocation5], 0
    %s16 = scalar_lea.sflag [#allocation5], 1
    %17 = vsyncpa %s16, 0
    loop: start=0, step=1, limit=4
    $region2: #{tpu_custom_call.1} parent=1 // loop_pre_header
      _
    $region3: #{tpu_custom_call.1} parent=1 // loop_header
      %s19 = sphi 0, %s23
      %p20 = scmp.ge.s32.totalorder %s19, 4
      %s29 = sphi 0, %s31
      %s32 = sphi 0, %s29
      %s33 = sphi 0, %s32
      %s49 = sphi 0, %s33
      %s53 = sphi 0, %s53
      %s55 = sphi 0, %s53
      %s56 = sphi 0, %s55
      %s70 = sphi 0, %s56
      %s74 = sphi 0, %s74
      %s76 = sphi 0, %s74
      %s77 = sphi 0, %s76
      %s91 = sphi 0, %s77
      %s95 = sphi 0, %s95
      %s97 = sphi 0, %s95
      %s98 = sphi 0, %s97
      %s112 = sphi 0, %s98
      %s116 = sphi 0, %s116
      %s118 = sphi 0, %s116
      %s119 = sphi 0, %s118
      %s133 = sphi 0, %s119
      %s139 = sphi 0, %s141
      %s142 = sphi 0, %s139
      %s143 = sphi 0, %s142
      %s159 = sphi 0, %s143
    $region4: #{tpu_custom_call.1} parent=1 // loop_header_branch
      %22 = sbr.rel (%p20) target = $region8
    $region5: #{tpu_custom_call.1} parent=1 // loop_body
      %s24 = ssub.s32 %s19, 1
      %s25 = ssub.s32 %s19, 2
      %s26 = sadd.s32 %s19, 1
      %s27 = ssub.s32 %s19, %s26
      %p28 = scmp.eq.s32.totalorder %s27, 0
      %s30 = sadd.s32 %s29, 1
      %s31 = scalar_select %p28, %s29, %s30
      %p34 = pneg %p28
      %p35 = scmp.eq.s32.totalorder %s19, 1
      %p36 = por %p34, %p35
      %p37 = scmp.ne.s32.totalorder %s29, %s32
      %p38 = scmp.eq.s32.totalorder %s19, 0
      %p39 = por %p37, %p38
      %p40 = scmp.ne.s32.totalorder %s29, %s32
      %p41 = scmp.eq.s32.totalorder %s24, 1
      %p42 = por %p40, %p41
      %p43 = scmp.ne.s32.totalorder %s32, %s33
      %p44 = scmp.eq.s32.totalorder %s24, 0
      %p45 = por %p43, %p44
      %p46 = scmp.ne.s32.totalorder %s32, %s33
      %p47 = scmp.eq.s32.totalorder %s25, 1
      %p48 = por %p46, %p47
      %p50 = scmp.ne.s32.totalorder %s33, %s49
      %p51 = scmp.eq.s32.totalorder %s25, 0
      %p52 = por %p50, %p51
      %s54 = sadd.s32 %s53, 1
      %p57 = scmp.eq.s32.totalorder %s19, 1
      %p58 = scmp.ne.s32.totalorder %s53, %s55
      %p59 = scmp.eq.s32.totalorder %s19, 0
      %p60 = por %p58, %p59
      %p61 = scmp.ne.s32.totalorder %s53, %s55
      %p62 = scmp.eq.s32.totalorder %s24, 1
      %p63 = por %p61, %p62
      %p64 = scmp.ne.s32.totalorder %s55, %s56
      %p65 = scmp.eq.s32.totalorder %s24, 0
      %p66 = por %p64, %p65
      %p67 = scmp.ne.s32.totalorder %s55, %s56
      %p68 = scmp.eq.s32.totalorder %s25, 1
      %p69 = por %p67, %p68
      %p71 = scmp.ne.s32.totalorder %s56, %s70
      %p72 = scmp.eq.s32.totalorder %s25, 0
      %p73 = por %p71, %p72
      %s75 = sadd.s32 %s74, 1
      %p78 = scmp.eq.s32.totalorder %s19, 1
      %p79 = scmp.ne.s32.totalorder %s74, %s76
      %p80 = scmp.eq.s32.totalorder %s19, 0
      %p81 = por %p79, %p80
      %p82 = scmp.ne.s32.totalorder %s74, %s76
      %p83 = scmp.eq.s32.totalorder %s24, 1
      %p84 = por %p82, %p83
      %p85 = scmp.ne.s32.totalorder %s76, %s77
      %p86 = scmp.eq.s32.totalorder %s24, 0
      %p87 = por %p85, %p86
      %p88 = scmp.ne.s32.totalorder %s76, %s77
      %p89 = scmp.eq.s32.totalorder %s25, 1
      %p90 = por %p88, %p89
      %p92 = scmp.ne.s32.totalorder %s77, %s91
      %p93 = scmp.eq.s32.totalorder %s25, 0
      %p94 = por %p92, %p93
      %s96 = sadd.s32 %s95, 1
      %p99 = scmp.eq.s32.totalorder %s19, 1
      %p100 = scmp.ne.s32.totalorder %s95, %s97
      %p101 = scmp.eq.s32.totalorder %s19, 0
      %p102 = por %p100, %p101
      %p103 = scmp.ne.s32.totalorder %s95, %s97
      %p104 = scmp.eq.s32.totalorder %s24, 1
      %p105 = por %p103, %p104
      %p106 = scmp.ne.s32.totalorder %s97, %s98
      %p107 = scmp.eq.s32.totalorder %s24, 0
      %p108 = por %p106, %p107
      %p109 = scmp.ne.s32.totalorder %s97, %s98
      %p110 = scmp.eq.s32.totalorder %s25, 1
      %p111 = por %p109, %p110
      %p113 = scmp.ne.s32.totalorder %s98, %s112
      %p114 = scmp.eq.s32.totalorder %s25, 0
      %p115 = por %p113, %p114
      %s117 = sadd.s32 %s116, 1
      %p120 = scmp.eq.s32.totalorder %s19, 1
      %p121 = scmp.ne.s32.totalorder %s116, %s118
      %p122 = scmp.eq.s32.totalorder %s19, 0
      %p123 = por %p121, %p122
      %p124 = scmp.ne.s32.totalorder %s116, %s118
      %p125 = scmp.eq.s32.totalorder %s24, 1
      %p126 = por %p124, %p125
      %p127 = scmp.ne.s32.totalorder %s118, %s119
      %p128 = scmp.eq.s32.totalorder %s24, 0
      %p129 = por %p127, %p128
      %p130 = scmp.ne.s32.totalorder %s118, %s119
      %p131 = scmp.eq.s32.totalorder %s25, 1
      %p132 = por %p130, %p131
      %p134 = scmp.ne.s32.totalorder %s119, %s133
      %p135 = scmp.eq.s32.totalorder %s25, 0
      %p136 = por %p134, %p135
      %s137 = ssub.s32 %s19, %s26
      %p138 = scmp.eq.s32.totalorder %s137, 0
      %s140 = sadd.s32 %s139, 1
      %s141 = scalar_select %p138, %s139, %s140
      %p144 = pneg %p138
      %p145 = scmp.eq.s32.totalorder %s19, 1
      %p146 = por %p144, %p145
      %p147 = scmp.ne.s32.totalorder %s139, %s142
      %p148 = scmp.eq.s32.totalorder %s19, 0
      %p149 = por %p147, %p148
      %p150 = scmp.ne.s32.totalorder %s139, %s142
      %p151 = scmp.eq.s32.totalorder %s24, 1
      %p152 = por %p150, %p151
      %p153 = scmp.ne.s32.totalorder %s142, %s143
      %p154 = scmp.eq.s32.totalorder %s24, 0
      %p155 = por %p153, %p154
      %p156 = scmp.ne.s32.totalorder %s142, %s143
      %p157 = scmp.eq.s32.totalorder %s25, 1
      %p158 = por %p156, %p157
      %p160 = scmp.ne.s32.totalorder %s143, %s159
      %p161 = scmp.eq.s32.totalorder %s25, 0
      %p162 = por %p160, %p161
      %p163 = scmp.le.s32.totalorder 1, %s19
      %p164 = scmp.lt.s32.totalorder %s19, 3
      %p165 = pnand %p163, %p164
      %p166 = pneg %p165
      // Predicated region
      $region9: #{tpu_custom_call.1} parent=5 // pred_check
        _
      $region10: #{tpu_custom_call.1} parent=5 // pred_check_branch
        %168 = sbr.rel (%p165) target = $region12
      $region11: #{tpu_custom_call.1} parent=5 // pred_region
        %s169 = ssub.s32 %s19, 1
        // Predicated region
        $region13: #{tpu_custom_call.1} parent=11 // pred_check
          %p170 = pneg %p66
        $region14: #{tpu_custom_call.1} parent=11 // pred_check_branch
          %172 = sbr.rel (%p170) target = $region16
        $region15: #{tpu_custom_call.1} parent=11 // pred_region
          _
        $region16: #{tpu_custom_call.1} parent=11 // pred_fallthru
          _
        // Predicated region
        $region17: #{tpu_custom_call.1} parent=11 // pred_check
          %p173 = pneg %p87
        $region18: #{tpu_custom_call.1} parent=11 // pred_check_branch
          %175 = sbr.rel (%p173) target = $region20
        $region19: #{tpu_custom_call.1} parent=11 // pred_region
          _
        $region20: #{tpu_custom_call.1} parent=11 // pred_fallthru
          _
        // Predicated region
        $region21: #{tpu_custom_call.1} parent=11 // pred_check
          %p176 = pneg %p108
        $region22: #{tpu_custom_call.1} parent=11 // pred_check_branch
          %178 = sbr.rel (%p176) target = $region24
        $region23: #{tpu_custom_call.1} parent=11 // pred_region
          _
        $region24: #{tpu_custom_call.1} parent=11 // pred_fallthru
          _
        // Predicated region
        $region25: #{tpu_custom_call.1} parent=11 // pred_check
          %p179 = pneg %p129
        $region26: #{tpu_custom_call.1} parent=11 // pred_check_branch
          %181 = sbr.rel (%p179) target = $region28
        $region27: #{tpu_custom_call.1} parent=11 // pred_region
          _
        $region28: #{tpu_custom_call.1} parent=11 // pred_fallthru
          _
      $region12: #{tpu_custom_call.1} parent=5 // pred_fallthru
        _
      %p182 = scmp.lt.s32.totalorder %s19, 2
      // Predicated region
      $region29: #{tpu_custom_call.1} parent=5 // pred_check
        %p183 = pneg %p182
      $region30: #{tpu_custom_call.1} parent=5 // pred_check_branch
        %185 = sbr.rel (%p183) target = $region32
      $region31: #{tpu_custom_call.1} parent=5 // pred_region
        // Predicated region
        $region33: #{tpu_custom_call.1} parent=31 // pred_check
          %p186 = pneg %p39
        $region34: #{tpu_custom_call.1} parent=31 // pred_check_branch
          %188 = sbr.rel (%p186) target = $region36
        $region35: #{tpu_custom_call.1} parent=31 // pred_region
          %s189 = sand.u32 %s29, 1
          %s190 = scalar_lea.sflag [#allocation4], %s189
          %s191 = sand.u32 %s29, 1
          %s192 = smul.addr %s191, 64
          %s193 = scalar_lea.vmem [#allocation3], %s192
          %s194 = smul.u32 4, %s19
          %s196 = ssub.s32 1024, 1024
          %197 = vsyncadd %s190, %s196
          %s198 = smul.addr %s194, 128
          %s199 = scalar_lea.hbm %s0, %s198
          %s200 = sshll.u32 %s193, 4
          %s201 = int_to_ptr.vmem [resolvable:$true] %s200
          %206 = dma.hbm_to_vmem [thread:$0]  %s199, 1024, %s201, %s190, 1024, 512, 32
        $region36: #{tpu_custom_call.1} parent=31 // pred_fallthru
          _
      $region32: #{tpu_custom_call.1} parent=5 // pred_fallthru
        _
      %p207 = scmp.le.s32.totalorder 1, %s19
      %p208 = scmp.lt.s32.totalorder %s19, 3
      %p209 = pnand %p207, %p208
      %p210 = pneg %p209
      // Predicated region
      $region37: #{tpu_custom_call.1} parent=5 // pred_check
        _
      $region38: #{tpu_custom_call.1} parent=5 // pred_check_branch
        %212 = sbr.rel (%p209) target = $region40
      $region39: #{tpu_custom_call.1} parent=5 // pred_region
        %s213 = ssub.s32 %s19, 1
        %s214 = sand.u32 %s32, 1
        %s215 = scalar_lea.sflag [#allocation4], %s214
        %s216 = sand.u32 %s32, 1
        %s217 = smul.addr %s216, 64
        %s218 = scalar_lea.vmem [#allocation3], %s217
        // Predicated region
        $region41: #{tpu_custom_call.1} parent=39 // pred_check
          %p219 = pneg %p45
        $region42: #{tpu_custom_call.1} parent=39 // pred_check_branch
          %221 = sbr.rel (%p219) target = $region44
        $region43: #{tpu_custom_call.1} parent=39 // pred_region
          %222 = dma.done %s215, 1024
        $region44: #{tpu_custom_call.1} parent=39 // pred_fallthru
          _
        %s223 = sand.u32 %s32, 1
        %s224 = scalar_lea.sflag [#allocation4], %s223
        %s225 = sand.u32 %s32, 1
        %s226 = smul.addr %s225, 64
        %s227 = scalar_lea.vmem [#allocation3], %s226
        %p228 = pneg %p45
        %p229 = pneg %p42
        %p230 = pneg %p66
        %p231 = pneg %p63
        %p232 = pneg %p87
        %p233 = pneg %p84
        %p234 = pneg %p108
        %p235 = pneg %p105
        %p236 = pneg %p129
        %p237 = pneg %p126
        %p238 = pneg %p155
        %p239 = pneg %p152
        %s240 = sand.u32 %s142, 1
        %s241 = scalar_lea.sflag [#allocation5], %s240
        %s242 = sand.u32 %s142, 1
        %s243 = smul.addr %s242, 4
        %s244 = scalar_lea.vmem [#allocation6], %s243
        %s245 = smul.u32 4, %s24
        %s246 = smul.u32 4, %s24
        %v247 = vld [vmem:[%s1] sm:$0xff]
        %v248 = vld [vmem:[%s1 + $0x8] sm:$0xff]
        %v249 = vld [vmem:[%s1 + $0x10] sm:$0xff]
        %v250 = vld [vmem:[%s1 + $0x18] sm:$0xff]
        %v251 = vld [vmem:[%s218] sm:$0xff]
        %v252 = vld [vmem:[%s218 + $0x8] sm:$0xff]
        %v253 = vld [vmem:[%s218 + $0x10] sm:$0xff]
        %v254 = vld [vmem:[%s218 + $0x18] sm:$0xff]
        %v255 = vld [vmem:[%s218 + $0x20] sm:$0x7]
        %v256 = vld [vmem:[%s218 + $0x28] sm:$0x7]
        %v257 = vld [vmem:[%s218 + $0x30] sm:$0x7]
        %v258 = vld [vmem:[%s218 + $0x38] sm:$0x7]
        %v259 = vld [vmem:[%s2] sm:$0xff]
        %v260 = vld [vmem:[%s2 + $0x8] sm:$0xff]
        %v261 = vld [vmem:[%s2 + $0x10] sm:$0xff]
        %v262 = vld [vmem:[%s2 + $0x18] sm:$0xff]
        %264 = vset.pattern.permute.xlu0 0
        %265 = vperm.xlu0 %264, %v259
        %v266 = vpop.permute.xlu0 %265
        %269 = vset.pattern.permute.xlu0 0
        %270 = vperm.xlu0 %269, %v260
        %v271 = vpop.permute.xlu0 %270
        %274 = vset.pattern.permute.xlu0 0
        %275 = vperm.xlu0 %274, %v261
        %v276 = vpop.permute.xlu0 %275
        %279 = vset.pattern.permute.xlu0 0
        %280 = vperm.xlu0 %279, %v262
        %v281 = vpop.permute.xlu0 %280
        %vm283 = vcmask 89088
        %v285 = vsel %vm283, %v247, 0
        %v288 = vsel %vm283, %v248, 0
        %v291 = vsel %vm283, %v249, 0
        %v294 = vsel %vm283, %v250, 0
        %vm296 = vcmask 1042432
        %v298 = vsel %vm296, %v255, 0
        %v301 = vsel %vm296, %v256, 0
        %v304 = vsel %vm296, %v257, 0
        %v307 = vsel %vm296, %v258, 0
        %309 = vmatprep.subr.mxu0 %v252
        %310 = vmatpush1.msra.mxu0 %v251
        %311 = vmatprep.subr.mxu0 %v301
        %312 = vmatpush1.msra.mxu0 %v298
        %313 = vmatprep.subr.mxu0 0.0
        %314 = vmatpush1.msra.mxu0 0.0
        %315 = vmatprep.subr.mxu0 0.0
        %316 = vmatpush1.msra.mxu0 0.0
        %317 = vmatprep.subr.mxu0 0.0
        %318 = vmatpush1.msra.mxu0 0.0
        %319 = vmatprep.subr.mxu0 0.0
        %320 = vmatpush1.msra.mxu0 0.0
        %321 = vmatprep.subr.mxu0 0.0
        %322 = vmatpush1.msra.mxu0 0.0
        %323 = vmatprep.subr.mxu0 0.0
        %324 = vmatpush1.msra.mxu0 0.0
        %325 = vmatprep.subr.mxu0 0.0
        %326 = vmatpush1.msra.mxu0 0.0
        %327 = vmatprep.subr.mxu0 0.0
        %328 = vmatpush1.msra.mxu0 0.0
        %329 = vmatprep.subr.mxu0 0.0
        %330 = vmatpush1.msra.mxu0 0.0
        %331 = vmatprep.subr.mxu0 0.0
        %332 = vmatpush1.msra.mxu0 0.0
        %333 = vmatprep.subr.mxu0 0.0
        %334 = vmatpush1.msra.mxu0 0.0
        %335 = vmatprep.subr.mxu0 0.0
        %336 = vmatpush1.msra.mxu0 0.0
        %337 = vmatprep.subr.mxu0 0.0
        %338 = vmatpush1.msra.mxu0 0.0
        %339 = vmatprep.subr.mxu0 0.0
        %340 = vmatpush1.msra.mxu0 0.0
        %341 = vmatprep.subr.mxu0 0.0
        %342 = vmatpush1.msra.mxu0 0.0
        %343 = vmatprep.subr.mxu0 0.0
        %344 = vmatpush1.msra.mxu0 0.0
        %345 = vmatprep.subr.mxu0 0.0
        %346 = vmatpush1.msra.mxu0 0.0
        %347 = vmatprep.subr.mxu0 0.0
        %348 = vmatpush1.msra.mxu0 0.0
        %349 = vmatprep.subr.mxu0 0.0
        %350 = vmatpush1.msra.mxu0 0.0
        %351 = vmatprep.subr.mxu0 0.0
        %352 = vmatpush1.msra.mxu0 0.0
        %353 = vmatprep.subr.mxu0 0.0
        %354 = vmatpush1.msra.mxu0 0.0
        %355 = vmatprep.subr.mxu0 0.0
        %356 = vmatpush1.msra.mxu0 0.0
        %357 = vmatprep.subr.mxu0 0.0
        %358 = vmatpush1.msra.mxu0 0.0
        %359 = vmatprep.subr.mxu0 0.0
        %360 = vmatpush1.msra.mxu0 0.0
        %361 = vmatprep.subr.mxu0 0.0
        %362 = vmatpush1.msra.mxu0 0.0
        %363 = vmatprep.subr.mxu0 0.0
        %364 = vmatpush1.msra.mxu0 0.0
        %365 = vmatprep.subr.mxu0 0.0
        %366 = vmatpush1.msra.mxu0 0.0
        %367 = vmatprep.subr.mxu0 0.0
        %368 = vmatpush1.msra.mxu0 0.0
        %369 = vmatprep.subr.mxu0 0.0
        %370 = vmatpush1.msra.mxu0 0.0
        %371 = vmatprep.subr.mxu0 0.0
        %372 = vmatpush1.msra.mxu0 0.0
        %373 = vmatprep.mubr.f32.mxu0 0.0
        %374 = vmatmul.mubr.f32.gmra.mrb[0].mxu0 %v285
        %v375 = vpop.f32.mrb[0].mxu0
        %v376 = vadd.f32 %v266, %v375
        %v377 = vpop.f32.mrb[0].mxu0
        %v378 = vadd.f32 %v266, %v377
        %379 = vmatprep.mubr.f32.mxu0 0.0
        %380 = vmatmul.mubr.f32.gmra.mrb[0].mxu0 %v288
        %v381 = vpop.f32.mrb[0].mxu0
        %v382 = vadd.f32 %v271, %v381
        %v383 = vpop.f32.mrb[0].mxu0
        %v384 = vadd.f32 %v271, %v383
        %385 = vmatprep.mubr.f32.mxu0 0.0
        %386 = vmatmul.mubr.f32.gmra.mrb[0].mxu0 %v291
        %v387 = vpop.f32.mrb[0].mxu0
        %v388 = vadd.f32 %v276, %v387
        %v389 = vpop.f32.mrb[0].mxu0
        %v390 = vadd.f32 %v276, %v389
        %391 = vmatprep.mubr.f32.mxu0 0.0
        %392 = vmatmul.mubr.f32.gmra.mrb[0].mxu0 %v294
        %v393 = vpop.f32.mrb[0].mxu0
        %v394 = vadd.f32 %v281, %v393
        %v395 = vpop.f32.mrb[0].mxu0
        %v396 = vadd.f32 %v281, %v395
        %397 = vdwg.mxu0
        %398 = vmatprep.subr.mxu0 %v254
        %399 = vmatpush1.msra.mxu0 %v253
        %400 = vmatprep.subr.mxu0 %v307
        %401 = vmatpush1.msra.mxu0 %v304
        %402 = vmatprep.subr.mxu0 0.0
        %403 = vmatpush1.msra.mxu0 0.0
        %404 = vmatprep.subr.mxu0 0.0
        %405 = vmatpush1.msra.mxu0 0.0
        %406 = vmatprep.subr.mxu0 0.0
        %407 = vmatpush1.msra.mxu0 0.0
        %408 = vmatprep.subr.mxu0 0.0
        %409 = vmatpush1.msra.mxu0 0.0
        %410 = vmatprep.subr.mxu0 0.0
        %411 = vmatpush1.msra.mxu0 0.0
        %412 = vmatprep.subr.mxu0 0.0
        %413 = vmatpush1.msra.mxu0 0.0
        %414 = vmatprep.subr.mxu0 0.0
        %415 = vmatpush1.msra.mxu0 0.0
        %416 = vmatprep.subr.mxu0 0.0
        %417 = vmatpush1.msra.mxu0 0.0
        %418 = vmatprep.subr.mxu0 0.0
        %419 = vmatpush1.msra.mxu0 0.0
        %420 = vmatprep.subr.mxu0 0.0
        %421 = vmatpush1.msra.mxu0 0.0
        %422 = vmatprep.subr.mxu0 0.0
        %423 = vmatpush1.msra.mxu0 0.0
        %424 = vmatprep.subr.mxu0 0.0
        %425 = vmatpush1.msra.mxu0 0.0
        %426 = vmatprep.subr.mxu0 0.0
        %427 = vmatpush1.msra.mxu0 0.0
        %428 = vmatprep.subr.mxu0 0.0
        %429 = vmatpush1.msra.mxu0 0.0
        %430 = vmatprep.subr.mxu0 0.0
        %431 = vmatpush1.msra.mxu0 0.0
        %432 = vmatprep.subr.mxu0 0.0
        %433 = vmatpush1.msra.mxu0 0.0
        %434 = vmatprep.subr.mxu0 0.0
        %435 = vmatpush1.msra.mxu0 0.0
        %436 = vmatprep.subr.mxu0 0.0
        %437 = vmatpush1.msra.mxu0 0.0
        %438 = vmatprep.subr.mxu0 0.0
        %439 = vmatpush1.msra.mxu0 0.0
        %440 = vmatprep.subr.mxu0 0.0
        %441 = vmatpush1.msra.mxu0 0.0
        %442 = vmatprep.subr.mxu0 0.0
        %443 = vmatpush1.msra.mxu0 0.0
        %444 = vmatprep.subr.mxu0 0.0
        %445 = vmatpush1.msra.mxu0 0.0
        %446 = vmatprep.subr.mxu0 0.0
        %447 = vmatpush1.msra.mxu0 0.0
        %448 = vmatprep.subr.mxu0 0.0
        %449 = vmatpush1.msra.mxu0 0.0
        %450 = vmatprep.subr.mxu0 0.0
        %451 = vmatpush1.msra.mxu0 0.0
        %452 = vmatprep.subr.mxu0 0.0
        %453 = vmatpush1.msra.mxu0 0.0
        %454 = vmatprep.subr.mxu0 0.0
        %455 = vmatpush1.msra.mxu0 0.0
        %456 = vmatprep.subr.mxu0 0.0
        %457 = vmatpush1.msra.mxu0 0.0
        %458 = vmatprep.subr.mxu0 0.0
        %459 = vmatpush1.msra.mxu0 0.0
        %460 = vmatprep.subr.mxu0 0.0
        %461 = vmatpush1.msra.mxu0 0.0
        %462 = vmatprep.mubr.f32.mxu0 0.0
        %463 = vmatmul.mubr.f32.gmra.mrb[0].mxu0 %v285
        %v464 = vpop.f32.mrb[0].mxu0
        %v465 = vadd.f32 %v266, %v464
        %v466 = vpop.f32.mrb[0].mxu0
        %v467 = vadd.f32 %v266, %v466
        %468 = vmatprep.mubr.f32.mxu0 0.0
        %469 = vmatmul.mubr.f32.gmra.mrb[0].mxu0 %v288
        %v470 = vpop.f32.mrb[0].mxu0
        %v471 = vadd.f32 %v271, %v470
        %v472 = vpop.f32.mrb[0].mxu0
        %v473 = vadd.f32 %v271, %v472
        %474 = vmatprep.mubr.f32.mxu0 0.0
        %475 = vmatmul.mubr.f32.gmra.mrb[0].mxu0 %v291
        %v476 = vpop.f32.mrb[0].mxu0
        %v477 = vadd.f32 %v276, %v476
        %v478 = vpop.f32.mrb[0].mxu0
        %v479 = vadd.f32 %v276, %v478
        %480 = vmatprep.mubr.f32.mxu0 0.0
        %481 = vmatmul.mubr.f32.gmra.mrb[0].mxu0 %v294
        %v482 = vpop.f32.mrb[0].mxu0
        %v483 = vadd.f32 %v281, %v482
        %v484 = vpop.f32.mrb[0].mxu0
        %v485 = vadd.f32 %v281, %v484
        %486 = vdwg.mxu0
        %v487 = vmax.f32 %v376, 0.0
        %v488 = vmax.f32 %v378, 0.0
        %v489 = vmax.f32 %v465, 0.0
        %v490 = vmax.f32 %v467, 0.0
        %v491 = vmax.f32 %v382, 0.0
        %v492 = vmax.f32 %v384, 0.0
        %v493 = vmax.f32 %v471, 0.0
        %v494 = vmax.f32 %v473, 0.0
        %v495 = vmax.f32 %v388, 0.0
        %v496 = vmax.f32 %v390, 0.0
        %v497 = vmax.f32 %v477, 0.0
        %v498 = vmax.f32 %v479, 0.0
        %v499 = vmax.f32 %v394, 0.0
        %v500 = vmax.f32 %v396, 0.0
        %v501 = vmax.f32 %v483, 0.0
        %v502 = vmax.f32 %v485, 0.0
        %v503 = vld [vmem:[%s3] sm:$0xff]
        %v504 = vld [vmem:[%s3 + $0x8] sm:$0xff]
        %v505 = vld [vmem:[%s3 + $0x10] sm:$0xff]
        %v506 = vld [vmem:[%s3 + $0x18] sm:$0xff]
        %508 = vset.pattern.permute.xlu0 0
        %509 = vperm.xlu0 %508, %v503
        %v510 = vpop.permute.xlu0 %509
        %513 = vset.pattern.permute.xlu0 0
        %514 = vperm.xlu0 %513, %v504
        %v515 = vpop.permute.xlu0 %514
        %518 = vset.pattern.permute.xlu0 0
        %519 = vperm.xlu0 %518, %v505
        %v520 = vpop.permute.xlu0 %519
        %523 = vset.pattern.permute.xlu0 0
        %524 = vperm.xlu0 %523, %v506
        %v525 = vpop.permute.xlu0 %524
        %v527 = vmul.f32 %v487, %v510
        %v528 = vmul.f32 %v488, %v510
        %v529 = vmul.f32 %v489, %v510
        %v530 = vmul.f32 %v490, %v510
        %v531 = vmul.f32 %v491, %v515
        %v532 = vmul.f32 %v492, %v515
        %v533 = vmul.f32 %v493, %v515
        %v534 = vmul.f32 %v494, %v515
        %v535 = vmul.f32 %v495, %v520
        %v536 = vmul.f32 %v496, %v520
        %v537 = vmul.f32 %v497, %v520
        %v538 = vmul.f32 %v498, %v520
        %v539 = vmul.f32 %v499, %v525
        %v540 = vmul.f32 %v500, %v525
        %v541 = vmul.f32 %v501, %v525
        %v542 = vmul.f32 %v502, %v525
        %v543 = vadd.f32 %v527, %v531
        %v544 = vadd.f32 %v543, %v535
        %v545 = vadd.f32 %v544, %v539
        %v546 = vrot.slane %v545, 4
        %v547 = vadd.f32 %v545, %v546
        %v548 = vrot.slane %v547, 2
        %v549 = vadd.f32 %v547, %v548
        %v550 = vrot.slane %v549, 1
        %v551 = vadd.f32 %v549, %v550
        %v552 = vadd.f32 %v528, %v532
        %v553 = vadd.f32 %v552, %v536
        %v554 = vadd.f32 %v553, %v540
        %v555 = vrot.slane %v554, 4
        %v556 = vadd.f32 %v554, %v555
        %v557 = vrot.slane %v556, 2
        %v558 = vadd.f32 %v556, %v557
        %v559 = vrot.slane %v558, 1
        %v560 = vadd.f32 %v558, %v559
        %v561 = vadd.f32 %v529, %v533
        %v562 = vadd.f32 %v561, %v537
        %v563 = vadd.f32 %v562, %v541
        %v564 = vrot.slane %v563, 4
        %v565 = vadd.f32 %v563, %v564
        %v566 = vrot.slane %v565, 2
        %v567 = vadd.f32 %v565, %v566
        %v568 = vrot.slane %v567, 1
        %v569 = vadd.f32 %v567, %v568
        %v570 = vadd.f32 %v530, %v534
        %v571 = vadd.f32 %v570, %v538
        %v572 = vadd.f32 %v571, %v542
        %v573 = vrot.slane %v572, 4
        %v574 = vadd.f32 %v572, %v573
        %v575 = vrot.slane %v574, 2
        %v576 = vadd.f32 %v574, %v575
        %v577 = vrot.slane %v576, 1
        %v578 = vadd.f32 %v576, %v577
        %v579 = vld [vmem:[#allocation2] sm:$0x1]
        %581 = vset.pattern.permute.xlu0 0
        %582 = vperm.xlu0 %581, %v579
        %v583 = vpop.permute.xlu0 %582
        %v585 = vlaneseq
        %v586 = vshrl.u32 %v585, 7
        %v587 = vsub.s32 0, %v586
        %v588 = vrot.slane %v583, %v587
        %v589 = vadd.f32 %v551, %v588
        %v590 = vadd.f32 %v560, %v588
        %v591 = vadd.f32 %v569, %v588
        %v592 = vadd.f32 %v578, %v588
        %v597 = vcombine.low %v589, %v590
        %v598 = vcombine.low %v591, %v592
        %v600 = vunpack.c.l.s4 1966171168
        %v601 = vunpack.c.0.s8 %v600
        %v602 = vlaneseq
        %v603 = vshrl.u32 %v602, 7
        %v604 = vsub.s32 %v601, %v603
        %v605 = vrot.slane %v597, %v604
        %v607 = vunpack.c.l.s4 1966171168
        %v608 = vunpack.c.0.s8 %v607
        %v609 = vlaneseq
        %v610 = vshrl.u32 %v609, 7
        %v611 = vsub.s32 %v608, %v610
        %v612 = vrot.slane %v598, %v611
        %v613 = vcombine.low %v605, %v612
        %v615 = vunpack.c.l.s4 1966171168
        %v616 = vunpack.c.0.s8 %v615
        %v617 = vlaneseq
        %v618 = vshrl.u32 %v617, 7
        %v619 = vsub.s32 %v616, %v618
        %v620 = vrot.slane %v613, %v619
        %v622 = vlaneseq
        %vm623 = vcmp.ge.s32.totalorder %v622, 0
        %vm624 = vcmp.lt.s32.totalorder %v622, 512
        %vm625 = vmand %vm623, %vm624
        %626 = vst.msk [vmem:[%s244] sm:$0xf] %vm625, %v620
        %s627 = sand.u32 %s142, 1
        %s628 = scalar_lea.sflag [#allocation5], %s627
        %s629 = sand.u32 %s142, 1
        %s630 = smul.addr %s629, 4
        %s631 = scalar_lea.vmem [#allocation6], %s630
        // Predicated region
        $region45: #{tpu_custom_call.1} parent=39 // pred_check
          %p632 = pneg %p152
        $region46: #{tpu_custom_call.1} parent=39 // pred_check_branch
          %634 = sbr.rel (%p632) target = $region48
        $region47: #{tpu_custom_call.1} parent=39 // pred_region
          %s635 = smul.u32 4, %s24
          %s637 = ssub.s32 64, 64
          %638 = vsyncadd %s628, %s637
          %s639 = smul.addr %s635, 16
          %s640 = scalar_lea.hbm %s5, %s639
          %s642 = sshll.u32 %s631, 4
          %s643 = int_to_ptr.vmem [resolvable:$true] %s642
          %645 = dma.vmem_to_hbm [thread:$0]  %s643, 64, %s640, %s628
        $region48: #{tpu_custom_call.1} parent=39 // pred_fallthru
          _
      $region40: #{tpu_custom_call.1} parent=5 // pred_fallthru
        _
      %p646 = scmp.le.s32.totalorder 2, %s19
      // Predicated region
      $region49: #{tpu_custom_call.1} parent=5 // pred_check
        %p647 = pneg %p646
      $region50: #{tpu_custom_call.1} parent=5 // pred_check_branch
        %649 = sbr.rel (%p647) target = $region52
      $region51: #{tpu_custom_call.1} parent=5 // pred_region
        %s650 = ssub.s32 %s19, 2
        // Predicated region
        $region53: #{tpu_custom_call.1} parent=51 // pred_check
          %p651 = pneg %p158
        $region54: #{tpu_custom_call.1} parent=51 // pred_check_branch
          %653 = sbr.rel (%p651) target = $region56
        $region55: #{tpu_custom_call.1} parent=51 // pred_region
          %s654 = sand.u32 %s143, 1
          %s655 = scalar_lea.sflag [#allocation5], %s654
          %s656 = sand.u32 %s143, 1
          %s657 = smul.addr %s656, 4
          %s658 = scalar_lea.vmem [#allocation6], %s657
          %659 = dma.done %s655, 64
        $region56: #{tpu_custom_call.1} parent=51 // pred_fallthru
          _
      $region52: #{tpu_custom_call.1} parent=5 // pred_fallthru
        _
    $region6: #{tpu_custom_call.1} parent=1 // loop_footer
      %s23 = sadd.s32 1, %s19
    $region7: #{tpu_custom_call.1} parent=1 // loop_footer_branch
      %18 = sbr.rel target = $region3
    $region8: #{tpu_custom_call.1} parent=1 // loop_exit
      _
    %660 = vsyncpa [#allocation4], 1
    %s661 = scalar_lea.sflag [#allocation4], 1
    %662 = vsyncpa %s661, 1
    %663 = vsyncpa [#allocation5], 1
    %s664 = scalar_lea.sflag [#allocation5], 1
    %665 = vsyncpa %s664, 1

</llo_original>
